<compile_context>
chip_gen: v7x
topology: tpu7x:2x2x1
jax: 0.10.0
libtpu: 0.0.40
codegen_flags: <defaults>
</compile_context>

<pallas_src>
import functools

import jax
import jax.numpy as jnp
from jax.experimental import pallas as pl
from jax.experimental.pallas import tpu as pltpu


def _round_up(x, m):
    return ((x + m - 1) // m) * m


def _cdiv(a, b):
    return (a + b - 1) // b


def _use_bf16_activations():
    """bf16 bias-add/tanh only on generations with a bf16 VPU/EUP (v6e, v7x)."""
    try:
        kind = jax.devices()[0].device_kind.lower()
    except Exception:
        return False
    for old in ("v2", "v3", "v4", "v5"):
        if old in kind:
            return False
    return True


def mlp_kernel(x_ref, w1_ref, b1_ref, w2_ref, b2_ref, w3_ref, b3_ref, o_ref,
               *, act_dtype):
    # Layer 1: in-kernel f32 -> bf16 cast (free VPU pack), f32 MXU accumulate.
    x = x_ref[...].astype(jnp.bfloat16)
    h1 = jnp.dot(x, w1_ref[...], preferred_element_type=jnp.float32)
    h1 = jnp.tanh((h1 + b1_ref[...]).astype(act_dtype))
    # Layer 2 (if act_dtype is bf16 the extra cast below is a no-op).
    h2 = jnp.dot(h1.astype(jnp.bfloat16), w2_ref[...],
                 preferred_element_type=jnp.float32)
    h2 = jnp.tanh((h2 + b2_ref[...]).astype(act_dtype))
    # Layer 3 (no activation); lane-dense bf16 store.
    o = jnp.dot(h2.astype(jnp.bfloat16), w3_ref[...],
                preferred_element_type=jnp.float32) + b3_ref[...]
    o_ref[...] = o.astype(o_ref.dtype)


def prepare_params(params):
    """One-time weight prep: bf16 matmul operands, 128-lane-padded final layer.

    params: dict with w1 (in,h), b1 (1,h), w2 (h,h), b2 (1,h),
            w3 (h,out), b3 (1,out)   -- all float32
            (weights stored pre-transposed vs. PyTorch: y = x @ W + b)
    """
    w1, b1 = params["w1"], params["b1"]
    w2, b2 = params["w2"], params["b2"]
    w3, b3 = params["w3"], params["b3"]
    hidden = w1.shape[1]
    out_dim = w3.shape[1]

    out_pad = _round_up(max(out_dim, 128), 128)
    w3p = jnp.zeros((hidden, out_pad), w3.dtype).at[:, :out_dim].set(w3)
    b3p = jnp.zeros((1, out_pad), b3.dtype).at[:, :out_dim].set(b3)

    return {
        "w1": w1.astype(jnp.bfloat16), "b1": b1.astype(jnp.float32),
        "w2": w2.astype(jnp.bfloat16), "b2": b2.astype(jnp.float32),
        "w3": w3p.astype(jnp.bfloat16), "b3": b3p.astype(jnp.float32),
        "out_dim": out_dim,
    }


def network_forward(x, prep, *, tb_max=8192):
    """Full MLP forward pass as a single batch-tiled Pallas kernel.

    x:    (batch, in_features) float32
    prep: output of prepare_params()
    returns (batch, out_dim) float32 Q-values.
    """
    w1, b1 = prep["w1"], prep["b1"]
    w2, b2 = prep["w2"], prep["b2"]
    w3, b3 = prep["w3"], prep["b3"]
    out_dim = prep["out_dim"]
    out_pad = w3.shape[1]

    batch, in_features = x.shape

    # ---- batch tiling: minimize padding; >=2 grid steps at large batch so
    # the "parallel" axis shards across both TCs on v7x. ----
    n_tiles = _cdiv(batch, tb_max)
    if batch >= 256:
        n_tiles = max(n_tiles, 2)
    tb = _round_up(_cdiv(batch, n_tiles), 16)     # 16: bf16 sublane group
    batch_p = n_tiles * tb

    xp = x.astype(jnp.float32)
    if batch_p != batch:
        xp = jnp.zeros((batch_p, in_features), xp.dtype).at[:batch].set(xp)

    act_dtype = jnp.bfloat16 if _use_bf16_activations() else jnp.float32

    def pinned(shape):
        # weights / biases: same block every grid step -> stay resident in VMEM
        return pl.BlockSpec(shape, lambda i: (0, 0))

    out = pl.pallas_call(
        functools.partial(mlp_kernel, act_dtype=act_dtype),
        out_shape=jax.ShapeDtypeStruct((batch_p, out_pad), jnp.bfloat16),
        grid=(n_tiles,),
        in_specs=[
            pl.BlockSpec((tb, in_features), lambda i: (i, 0)),
            pinned(w1.shape), pinned(b1.shape),
            pinned(w2.shape), pinned(b2.shape),
            pinned(w3.shape), pinned(b3.shape),
        ],
        out_specs=pl.BlockSpec((tb, out_pad), lambda i: (i, 0)),
        compiler_params=pltpu.CompilerParams(
            dimension_semantics=("parallel",),
        ),
    )(xp, w1, b1, w2, b2, w3, b3)

    return out[:batch, :out_dim].astype(jnp.float32)


def init_params(key, in_features, hidden_dim, output_dim):
    """Deterministic init matching nn.Linear's U(-1/sqrt(fan_in), 1/sqrt(fan_in))."""
    ks = jax.random.split(key, 6)

    def linear(kw, kb, fan_in, fan_out):
        bound = 1.0 / jnp.sqrt(jnp.float32(fan_in))
        # stored as (in, out) == PyTorch weight.T
        w = jax.random.uniform(kw, (fan_in, fan_out), jnp.float32, -bound, bound)
        b = jax.random.uniform(kb, (1, fan_out), jnp.float32, -bound, bound)
        return w, b

    w1, b1 = linear(ks[0], ks[1], in_features, hidden_dim)
    w2, b2 = linear(ks[2], ks[3], hidden_dim, hidden_dim)
    w3, b3 = linear(ks[4], ks[5], hidden_dim, output_dim)
    return {"w1": w1, "b1": b1, "w2": w2, "b2": b2, "w3": w3, "b3": b3}


def reference_forward(x, p):
    # Pure f32 reference of the PyTorch forward.
    h1 = jnp.tanh(x @ p["w1"] + p["b1"])
    h2 = jnp.tanh(h1 @ p["w2"] + p["b2"])
    return h2 @ p["w3"] + p["b3"]


if __name__ == "__main__":
    # Small shapes consistent with the module: input_dim=(4,4) -> 16 features,
    # hidden_dim=32, output_dim=4 actions, batch=8.
    batch, in_features, hidden_dim, output_dim = 8, 16, 32, 4

    key = jax.random.PRNGKey(0)
    k_x, k_p = jax.random.split(key)
    x = jax.random.normal(k_x, (batch, in_features), dtype=jnp.float32)
    params = init_params(k_p, in_features, hidden_dim, output_dim)

    # One-time weight prep (bf16 cast + lane-padded final layer).
    prep = prepare_params(params)

    q_values = network_forward(x, prep)
    jax.block_until_ready(q_values)

    # Correctness check against pure-JAX f32 reference (kernel uses bf16 matmul
    # operands / bf16 output with f32 accumulation, so tolerance reflects bf16).
    ref = reference_forward(x, params)
    assert q_values.shape == (batch, output_dim)
    assert jnp.allclose(q_values, ref, atol=5e-2, rtol=5e-2), (
        float(jnp.max(jnp.abs(q_values - ref)))
    )

    # act()-style greedy action for the first observation (argmax over dim=1).
    _ = int(jnp.argmax(q_values, axis=1)[0])

    print("KERNEL_OK")
</pallas_src>

<mosaic_0001>
module attributes {stable_mosaic.version = 11 : i64} {
  func.func @mlp_kernel(%arg0: i32, %arg1: memref<16x16xf32, #tpu.memory_space<vmem>>, %arg2: memref<16x32xbf16, #tpu.memory_space<vmem>>, %arg3: memref<1x32xf32, #tpu.memory_space<vmem>>, %arg4: memref<32x32xbf16, #tpu.memory_space<vmem>>, %arg5: memref<1x32xf32, #tpu.memory_space<vmem>>, %arg6: memref<32x128xbf16, #tpu.memory_space<vmem>>, %arg7: memref<1x128xf32, #tpu.memory_space<vmem>>, %arg8: memref<16x128xbf16, #tpu.memory_space<vmem>>) attributes {dimension_semantics = [#tpu.dimension_semantics<parallel>], iteration_bounds = array<i64: 1>, scalar_prefetch = 0 : i64, scratch_operands = 0 : i64, tpu.core_type = #tpu.core_type<tc>, window_params = [{transform_indices = @transform_0, window_bounds = array<i64: 16, 16>}, {pipeline_mode = #tpu.pipeline_mode<synchronous>, transform_indices = @transform_1, window_bounds = array<i64: 16, 32>}, {pipeline_mode = #tpu.pipeline_mode<synchronous>, transform_indices = @transform_2, window_bounds = array<i64: 1, 32>}, {pipeline_mode = #tpu.pipeline_mode<synchronous>, transform_indices = @transform_3, window_bounds = array<i64: 32, 32>}, {pipeline_mode = #tpu.pipeline_mode<synchronous>, transform_indices = @transform_4, window_bounds = array<i64: 1, 32>}, {pipeline_mode = #tpu.pipeline_mode<synchronous>, transform_indices = @transform_5, window_bounds = array<i64: 32, 128>}, {pipeline_mode = #tpu.pipeline_mode<synchronous>, transform_indices = @transform_6, window_bounds = array<i64: 1, 128>}, {transform_indices = @transform_7, window_bounds = array<i64: 16, 128>}]} {
    %c0 = arith.constant 0 : index
    %c0_0 = arith.constant 0 : index
    %0 = vector.load %arg1[%c0, %c0_0] : memref<16x16xf32, #tpu.memory_space<vmem>>, vector<16x16xf32>
    %1 = arith.truncf %0 : vector<16x16xf32> to vector<16x16xbf16>
    %c0_1 = arith.constant 0 : index
    %c0_2 = arith.constant 0 : index
    %2 = vector.load %arg2[%c0_1, %c0_2] : memref<16x32xbf16, #tpu.memory_space<vmem>>, vector<16x32xbf16>
    %cst = arith.constant dense<0.000000e+00> : vector<16x32xf32>
    %3 = tpu.matmul %1, %2, %cst {dimension_numbers = #tpu.dot_dimension_numbers<[1], [0], [0], [1], [0, 0, 1, 1], [], []>} : vector<16x16xbf16>, vector<16x32xbf16>, vector<16x32xf32> -> vector<16x32xf32>
    %c0_3 = arith.constant 0 : index
    %c0_4 = arith.constant 0 : index
    %4 = vector.load %arg3[%c0_3, %c0_4] : memref<1x32xf32, #tpu.memory_space<vmem>>, vector<1x32xf32>
    %5 = vector.broadcast %4 : vector<1x32xf32> to vector<16x32xf32>
    %6 = arith.addf %3, %5 : vector<16x32xf32>
    %7 = arith.truncf %6 : vector<16x32xf32> to vector<16x32xbf16>
    %8 = math.tanh %7 : vector<16x32xbf16>
    %c0_5 = arith.constant 0 : index
    %c0_6 = arith.constant 0 : index
    %9 = vector.load %arg4[%c0_5, %c0_6] : memref<32x32xbf16, #tpu.memory_space<vmem>>, vector<32x32xbf16>
    %cst_7 = arith.constant dense<0.000000e+00> : vector<16x32xf32>
    %10 = tpu.matmul %8, %9, %cst_7 {dimension_numbers = #tpu.dot_dimension_numbers<[1], [0], [0], [1], [0, 0, 1, 1], [], []>} : vector<16x32xbf16>, vector<32x32xbf16>, vector<16x32xf32> -> vector<16x32xf32>
    %c0_8 = arith.constant 0 : index
    %c0_9 = arith.constant 0 : index
    %11 = vector.load %arg5[%c0_8, %c0_9] : memref<1x32xf32, #tpu.memory_space<vmem>>, vector<1x32xf32>
    %12 = vector.broadcast %11 : vector<1x32xf32> to vector<16x32xf32>
    %13 = arith.addf %10, %12 : vector<16x32xf32>
    %14 = arith.truncf %13 : vector<16x32xf32> to vector<16x32xbf16>
    %15 = math.tanh %14 : vector<16x32xbf16>
    %c0_10 = arith.constant 0 : index
    %c0_11 = arith.constant 0 : index
    %16 = vector.load %arg6[%c0_10, %c0_11] : memref<32x128xbf16, #tpu.memory_space<vmem>>, vector<32x128xbf16>
    %cst_12 = arith.constant dense<0.000000e+00> : vector<16x128xf32>
    %17 = tpu.matmul %15, %16, %cst_12 {dimension_numbers = #tpu.dot_dimension_numbers<[1], [0], [0], [1], [0, 0, 1, 1], [], []>} : vector<16x32xbf16>, vector<32x128xbf16>, vector<16x128xf32> -> vector<16x128xf32>
    %c0_13 = arith.constant 0 : index
    %c0_14 = arith.constant 0 : index
    %18 = vector.load %arg7[%c0_13, %c0_14] : memref<1x128xf32, #tpu.memory_space<vmem>>, vector<1x128xf32>
    %19 = vector.broadcast %18 : vector<1x128xf32> to vector<16x128xf32>
    %20 = arith.addf %17, %19 : vector<16x128xf32>
    %21 = arith.truncf %20 : vector<16x128xf32> to vector<16x128xbf16>
    %c0_15 = arith.constant 0 : index
    %c0_16 = arith.constant 0 : index
    %22 = vector.load %arg8[%c0_15, %c0_16] : memref<16x128xbf16, #tpu.memory_space<vmem>>, vector<16x128xbf16>
    tpu.vector_store %arg8[%c0_15, %c0_16], %21 {strides = array<i32>} : memref<16x128xbf16, #tpu.memory_space<vmem>>, vector<16x128xbf16>,
    return
  }
  func.func @transform_0(%arg0: i32) -> (i32, i32) {
    %c0_i32 = arith.constant 0 : i32
    %c0_i32_0 = arith.constant 0 : i32
    return %arg0, %c0_i32 : i32, i32
  }
  func.func @transform_1(%arg0: i32) -> (i32, i32) {
    %c0_i32 = arith.constant 0 : i32
    %c0_i32_0 = arith.constant 0 : i32
    %c0_i32_1 = arith.constant 0 : i32
    return %c0_i32, %c0_i32_0 : i32, i32
  }
  func.func @transform_2(%arg0: i32) -> (i32, i32) {
    %c0_i32 = arith.constant 0 : i32
    %c0_i32_0 = arith.constant 0 : i32
    %c0_i32_1 = arith.constant 0 : i32
    return %c0_i32, %c0_i32_0 : i32, i32
  }
  func.func @transform_3(%arg0: i32) -> (i32, i32) {
    %c0_i32 = arith.constant 0 : i32
    %c0_i32_0 = arith.constant 0 : i32
    %c0_i32_1 = arith.constant 0 : i32
    return %c0_i32, %c0_i32_0 : i32, i32
  }
  func.func @transform_4(%arg0: i32) -> (i32, i32) {
    %c0_i32 = arith.constant 0 : i32
    %c0_i32_0 = arith.constant 0 : i32
    %c0_i32_1 = arith.constant 0 : i32
    return %c0_i32, %c0_i32_0 : i32, i32
  }
  func.func @transform_5(%arg0: i32) -> (i32, i32) {
    %c0_i32 = arith.constant 0 : i32
    %c0_i32_0 = arith.constant 0 : i32
    %c0_i32_1 = arith.constant 0 : i32
    return %c0_i32, %c0_i32_0 : i32, i32
  }
  func.func @transform_6(%arg0: i32) -> (i32, i32) {
    %c0_i32 = arith.constant 0 : i32
    %c0_i32_0 = arith.constant 0 : i32
    %c0_i32_1 = arith.constant 0 : i32
    return %c0_i32, %c0_i32_0 : i32, i32
  }
  func.func @transform_7(%arg0: i32) -> (i32, i32) {
    %c0_i32 = arith.constant 0 : i32
    %c0_i32_0 = arith.constant 0 : i32
    return %arg0, %c0_i32 : i32, i32
  }
}

</mosaic_0001>

<llo_original>
// kernel: tpu_custom_call.1
$region0: #{tpu_custom_call.1}
  #allocation0 [shape = 'u32[]', space=smem, size = 0x4, offset = 0x4, fixed_abs, tag = 'smem constant byte address 0x4 - core index']
  #allocation1 [shape = 'u32[144,128]{1,0:T(1,128)}', space=vmem, size = 0x12000, scoped, tag = 'internal scratch']
  %s0 = inlined_call_operand.hbm [shape: f32[16,16], index: 0, kind: input, shape index: {}]
  %s1 = inlined_call_operand.hbm [shape: bf16[16,32], index: 1, kind: input, shape index: {}]
  %s2 = inlined_call_operand.vmem [shape: f32[1,32], index: 2, kind: input, shape index: {}]
  %s3 = inlined_call_operand.hbm [shape: bf16[32,32], index: 3, kind: input, shape index: {}]
  %s4 = inlined_call_operand.vmem [shape: f32[1,32], index: 4, kind: input, shape index: {}]
  %s5 = inlined_call_operand.vmem [shape: bf16[32,128], index: 5, kind: input, shape index: {}]
  %s6 = inlined_call_operand.vmem [shape: f32[1,128], index: 6, kind: input, shape index: {}]
  %s7 = inlined_call_operand.hbm [shape: bf16[16,128], index: 7, kind: output, shape index: {}]
  %s8 = sld [smem:[#allocation0]]
  $region50: #{tpu_custom_call.1} parent=0
    _
  %s10 = ssub.s32 1, %s8
  %s11 = scalar_select 0, %s10, %s8
  $region1: #{tpu_custom_call.1} parent=0
    #allocation2 [shape = 'u8[8192]{0}', space=vmem, size = 0x2000, scoped, tag = 'input window, operand 0, single buffered']
    #allocation3 [shape = 's32[1]{0}', space=sflag, size = 0x4, scoped, tag = 'scoped memory for tpu_custom_call.1']
    #allocation4 [shape = 's32[1]{0}', space=sflag, size = 0x4, scoped, tag = 'scoped memory for tpu_custom_call.1']
    #allocation5 [shape = 'u8[4096]{0}', space=vmem, size = 0x1000, scoped, tag = 'input window, operand 1, single buffered']
    #allocation6 [shape = 's32[1]{0}', space=sflag, size = 0x4, scoped, tag = 'scoped memory for tpu_custom_call.1']
    #allocation7 [shape = 'u8[8192]{0}', space=vmem, size = 0x2000, scoped, tag = 'input window, operand 3, single buffered']
    #allocation8 [shape = 'u8[4096]{0}', space=vmem, size = 0x1000, scoped, tag = 'output window, operand 0, single buffered']
    %12 = vsyncpa [#allocation3], 0
    %13 = vsyncpa [#allocation6], 0
    %14 = vsyncpa [#allocation4], 0
    // Predicated region
    $region2: #{tpu_custom_call.1} parent=1 // pred_check
      _
    $region3: #{tpu_custom_call.1} parent=1 // pred_check_branch
      %16 = sbr.rel (0) target = $region5
    $region4: #{tpu_custom_call.1} parent=1 // pred_region
      %s18 = ssub.s32 256, 256
      %19 = vsyncadd [#allocation3], %s18
      %s20 = sshll.u32 [#allocation2], 4
      %s21 = int_to_ptr.vmem [resolvable:$true] %s20
      %26 = dma.hbm_to_vmem [thread:$0]  %s0, 256, %s21, [#allocation3], 128, 128, 8
    $region5: #{tpu_custom_call.1} parent=1 // pred_fallthru
      _
    // Predicated region
    $region6: #{tpu_custom_call.1} parent=1 // pred_check
      _
    $region7: #{tpu_custom_call.1} parent=1 // pred_check_branch
      %28 = sbr.rel (0) target = $region9
    $region8: #{tpu_custom_call.1} parent=1 // pred_region
      %s30 = ssub.s32 128, 128
      %31 = vsyncadd [#allocation6], %s30
      %s32 = sshll.u32 [#allocation5], 4
      %s33 = int_to_ptr.vmem [resolvable:$true] %s32
      %38 = dma.hbm_to_vmem [thread:$0]  %s1, 128, %s33, [#allocation6], 64, 64, 4
    $region9: #{tpu_custom_call.1} parent=1 // pred_fallthru
      _
    // Predicated region
    $region10: #{tpu_custom_call.1} parent=1 // pred_check
      _
    $region11: #{tpu_custom_call.1} parent=1 // pred_check_branch
      %40 = sbr.rel (0) target = $region13
    $region12: #{tpu_custom_call.1} parent=1 // pred_region
      _
    $region13: #{tpu_custom_call.1} parent=1 // pred_fallthru
      _
    // Predicated region
    $region14: #{tpu_custom_call.1} parent=1 // pred_check
      _
    $region15: #{tpu_custom_call.1} parent=1 // pred_check_branch
      %42 = sbr.rel (0) target = $region17
    $region16: #{tpu_custom_call.1} parent=1 // pred_region
      %s44 = ssub.s32 256, 256
      %45 = vsyncadd [#allocation6], %s44
      %s46 = sshll.u32 [#allocation7], 4
      %s47 = int_to_ptr.vmem [resolvable:$true] %s46
      %52 = dma.hbm_to_vmem [thread:$0]  %s3, 256, %s47, [#allocation6], 64, 64, 4
    $region17: #{tpu_custom_call.1} parent=1 // pred_fallthru
      _
    // Predicated region
    $region18: #{tpu_custom_call.1} parent=1 // pred_check
      _
    $region19: #{tpu_custom_call.1} parent=1 // pred_check_branch
      %54 = sbr.rel (0) target = $region21
    $region20: #{tpu_custom_call.1} parent=1 // pred_region
      _
    $region21: #{tpu_custom_call.1} parent=1 // pred_fallthru
      _
    // Predicated region
    $region22: #{tpu_custom_call.1} parent=1 // pred_check
      _
    $region23: #{tpu_custom_call.1} parent=1 // pred_check_branch
      %56 = sbr.rel (0) target = $region25
    $region24: #{tpu_custom_call.1} parent=1 // pred_region
      _
    $region25: #{tpu_custom_call.1} parent=1 // pred_fallthru
      _
    // Predicated region
    $region26: #{tpu_custom_call.1} parent=1 // pred_check
      _
    $region27: #{tpu_custom_call.1} parent=1 // pred_check_branch
      %58 = sbr.rel (0) target = $region29
    $region28: #{tpu_custom_call.1} parent=1 // pred_region
      _
    $region29: #{tpu_custom_call.1} parent=1 // pred_fallthru
      _
    // Predicated region
    $region30: #{tpu_custom_call.1} parent=1 // pred_check
      _
    $region31: #{tpu_custom_call.1} parent=1 // pred_check_branch
      %60 = sbr.rel (0) target = $region33
    $region32: #{tpu_custom_call.1} parent=1 // pred_region
      %61 = dma.done [#allocation3], 256
    $region33: #{tpu_custom_call.1} parent=1 // pred_fallthru
      _
    // Predicated region
    $region34: #{tpu_custom_call.1} parent=1 // pred_check
      _
    $region35: #{tpu_custom_call.1} parent=1 // pred_check_branch
      %63 = sbr.rel (0) target = $region37
    $region36: #{tpu_custom_call.1} parent=1 // pred_region
      %64 = dma.done [#allocation6], 128
    $region37: #{tpu_custom_call.1} parent=1 // pred_fallthru
      _
    // Predicated region
    $region38: #{tpu_custom_call.1} parent=1 // pred_check
      _
    $region39: #{tpu_custom_call.1} parent=1 // pred_check_branch
      %66 = sbr.rel (0) target = $region41
    $region40: #{tpu_custom_call.1} parent=1 // pred_region
      %67 = dma.done [#allocation6], 256
    $region41: #{tpu_custom_call.1} parent=1 // pred_fallthru
      _
    %v69 = vld [vmem:[#allocation2] sm:$0xff]
    %v70 = vld [vmem:[#allocation2 + $0x8] sm:$0xff]
    %v71 = vpack.c.bf16 %v70, %v69
    %v72 = vld [vmem:[#allocation5] sm:$0xf]
    %v73 = vld [vmem:[#allocation5 + $0x4] sm:$0xf]
    %v74 = vld [vmem:[%s2] sm:$0x1]
    %v76 = vlaneseq
    %v77 = vshrl.u32 %v76, 7
    %v78 = vsub.s32 0, %v77
    %v79 = vrot.slane %v74, %v78
    %v83 = vunpack.c.l.b16 %v72
    %v84 = vunpack.c.l.b16 %v73
    %v85 = vpack.c.b16 %v84, %v83
    %vm87 = vcmask 130048
    %v89 = vsel %vm87, %v71, 0
    %91 = vmatprep.subr.bf16.mxu0 0
    %92 = vmatpush1.bf16.msra.mxu0 %v85
    %93 = vmatprep.subr.bf16.mxu0 0
    %94 = vmatpush1.bf16.msra.mxu0 0
    %95 = vmatprep.subr.bf16.mxu0 0
    %96 = vmatpush1.bf16.msra.mxu0 0
    %97 = vmatprep.subr.bf16.mxu0 0
    %98 = vmatpush1.bf16.msra.mxu0 0
    %99 = vmatprep.subr.bf16.mxu0 0
    %100 = vmatpush1.bf16.msra.mxu0 0
    %101 = vmatprep.subr.bf16.mxu0 0
    %102 = vmatpush1.bf16.msra.mxu0 0
    %103 = vmatprep.subr.bf16.mxu0 0
    %104 = vmatpush1.bf16.msra.mxu0 0
    %105 = vmatprep.subr.bf16.mxu0 0
    %106 = vmatpush1.bf16.msra.mxu0 0
    %107 = vmatprep.subr.bf16.mxu0 0
    %108 = vmatpush1.bf16.msra.mxu0 0
    %109 = vmatprep.subr.bf16.mxu0 0
    %110 = vmatpush1.bf16.msra.mxu0 0
    %111 = vmatprep.subr.bf16.mxu0 0
    %112 = vmatpush1.bf16.msra.mxu0 0
    %113 = vmatprep.subr.bf16.mxu0 0
    %114 = vmatpush1.bf16.msra.mxu0 0
    %115 = vmatprep.subr.bf16.mxu0 0
    %116 = vmatpush1.bf16.msra.mxu0 0
    %117 = vmatprep.subr.bf16.mxu0 0
    %118 = vmatpush1.bf16.msra.mxu0 0
    %119 = vmatprep.subr.bf16.mxu0 0
    %120 = vmatpush1.bf16.msra.mxu0 0
    %121 = vmatprep.subr.bf16.mxu0 0
    %122 = vmatpush1.bf16.msra.mxu0 0
    %123 = vmatprep.mubr.bf16.mxu0 0
    %124 = vmatmul.mubr.bf16.gmra.mrb[0].mxu0 %v89
    %v125 = vpop.f32.mrb[0].mxu0
    %v126 = vadd.f32 %v79, %v125
    %v127 = vpop.f32.mrb[0].mxu0
    %v128 = vpop.f32.mrb[0].mxu0
    %v129 = vadd.f32 %v79, %v128
    %v130 = vpop.f32.mrb[0].mxu0
    %131 = vdwg.mxu0
    %v132 = vpack.c.bf16 %v129, %v126
    %v133 = vtanh.bf16.pop %v132
    %v134 = vld [vmem:[#allocation7] sm:$0xf]
    %v135 = vld [vmem:[#allocation7 + $0x4] sm:$0xf]
    %v136 = vld [vmem:[#allocation7 + $0x8] sm:$0xf]
    %v137 = vld [vmem:[#allocation7 + $0xc] sm:$0xf]
    %v138 = vld [vmem:[%s4] sm:$0x1]
    %v140 = vlaneseq
    %v141 = vshrl.u32 %v140, 7
    %v142 = vsub.s32 0, %v141
    %v143 = vrot.slane %v138, %v142
    %v149 = vunpack.c.l.b16 %v134
    %v150 = vunpack.c.l.b16 %v135
    %v151 = vunpack.c.l.b16 %v136
    %v152 = vunpack.c.l.b16 %v137
    %v153 = vpack.c.b16 %v150, %v149
    %v154 = vpack.c.b16 %v152, %v151
    %vm157 = vcmask 261120
    %v159 = vsel %vm157, %v133, 0
    %161 = vmatprep.subr.bf16.mxu0 0
    %162 = vmatpush1.bf16.msra.mxu0 %v153
    %163 = vmatprep.subr.bf16.mxu0 0
    %164 = vmatpush1.bf16.msra.mxu0 %v154
    %165 = vmatprep.subr.bf16.mxu0 0
    %166 = vmatpush1.bf16.msra.mxu0 0
    %167 = vmatprep.subr.bf16.mxu0 0
    %168 = vmatpush1.bf16.msra.mxu0 0
    %169 = vmatprep.subr.bf16.mxu0 0
    %170 = vmatpush1.bf16.msra.mxu0 0
    %171 = vmatprep.subr.bf16.mxu0 0
    %172 = vmatpush1.bf16.msra.mxu0 0
    %173 = vmatprep.subr.bf16.mxu0 0
    %174 = vmatpush1.bf16.msra.mxu0 0
    %175 = vmatprep.subr.bf16.mxu0 0
    %176 = vmatpush1.bf16.msra.mxu0 0
    %177 = vmatprep.subr.bf16.mxu0 0
    %178 = vmatpush1.bf16.msra.mxu0 0
    %179 = vmatprep.subr.bf16.mxu0 0
    %180 = vmatpush1.bf16.msra.mxu0 0
    %181 = vmatprep.subr.bf16.mxu0 0
    %182 = vmatpush1.bf16.msra.mxu0 0
    %183 = vmatprep.subr.bf16.mxu0 0
    %184 = vmatpush1.bf16.msra.mxu0 0
    %185 = vmatprep.subr.bf16.mxu0 0
    %186 = vmatpush1.bf16.msra.mxu0 0
    %187 = vmatprep.subr.bf16.mxu0 0
    %188 = vmatpush1.bf16.msra.mxu0 0
    %189 = vmatprep.subr.bf16.mxu0 0
    %190 = vmatpush1.bf16.msra.mxu0 0
    %191 = vmatprep.subr.bf16.mxu0 0
    %192 = vmatpush1.bf16.msra.mxu0 0
    %193 = vmatprep.mubr.bf16.mxu0 0
    %194 = vmatmul.mubr.bf16.gmra.mrb[0].mxu0 %v159
    %v195 = vpop.f32.mrb[0].mxu0
    %v196 = vadd.f32 %v143, %v195
    %v197 = vpop.f32.mrb[0].mxu0
    %v198 = vpop.f32.mrb[0].mxu0
    %v199 = vadd.f32 %v143, %v198
    %v200 = vpop.f32.mrb[0].mxu0
    %201 = vdwg.mxu0
    %v202 = vpack.c.bf16 %v199, %v196
    %v203 = vtanh.bf16.pop %v202
    %v204 = vld [vmem:[%s5] sm:$0xf]
    %v205 = vld [vmem:[%s5 + $0x4] sm:$0xf]
    %v206 = vld [vmem:[%s5 + $0x8] sm:$0xf]
    %v207 = vld [vmem:[%s5 + $0xc] sm:$0xf]
    %v208 = vld [vmem:[%s6] sm:$0x1]
    %v210 = vlaneseq
    %v211 = vshrl.u32 %v210, 7
    %v212 = vsub.s32 0, %v211
    %v213 = vrot.slane %v208, %v212
    %v219 = vunpack.c.l.b16 %v204
    %v220 = vunpack.c.l.b16 %v205
    %v221 = vunpack.c.l.b16 %v206
    %v222 = vunpack.c.l.b16 %v207
    %v223 = vpack.c.b16 %v220, %v219
    %v224 = vpack.c.b16 %v222, %v221
    %v228 = vsel %vm157, %v203, 0
    %230 = vmatprep.subr.bf16.mxu0 0
    %231 = vmatpush1.bf16.msra.mxu0 %v223
    %232 = vmatprep.subr.bf16.mxu0 0
    %233 = vmatpush1.bf16.msra.mxu0 %v224
    %234 = vmatprep.subr.bf16.mxu0 0
    %235 = vmatpush1.bf16.msra.mxu0 0
    %236 = vmatprep.subr.bf16.mxu0 0
    %237 = vmatpush1.bf16.msra.mxu0 0
    %238 = vmatprep.subr.bf16.mxu0 0
    %239 = vmatpush1.bf16.msra.mxu0 0
    %240 = vmatprep.subr.bf16.mxu0 0
    %241 = vmatpush1.bf16.msra.mxu0 0
    %242 = vmatprep.subr.bf16.mxu0 0
    %243 = vmatpush1.bf16.msra.mxu0 0
    %244 = vmatprep.subr.bf16.mxu0 0
    %245 = vmatpush1.bf16.msra.mxu0 0
    %246 = vmatprep.subr.bf16.mxu0 0
    %247 = vmatpush1.bf16.msra.mxu0 0
    %248 = vmatprep.subr.bf16.mxu0 0
    %249 = vmatpush1.bf16.msra.mxu0 0
    %250 = vmatprep.subr.bf16.mxu0 0
    %251 = vmatpush1.bf16.msra.mxu0 0
    %252 = vmatprep.subr.bf16.mxu0 0
    %253 = vmatpush1.bf16.msra.mxu0 0
    %254 = vmatprep.subr.bf16.mxu0 0
    %255 = vmatpush1.bf16.msra.mxu0 0
    %256 = vmatprep.subr.bf16.mxu0 0
    %257 = vmatpush1.bf16.msra.mxu0 0
    %258 = vmatprep.subr.bf16.mxu0 0
    %259 = vmatpush1.bf16.msra.mxu0 0
    %260 = vmatprep.subr.bf16.mxu0 0
    %261 = vmatpush1.bf16.msra.mxu0 0
    %262 = vmatprep.mubr.bf16.mxu0 0
    %263 = vmatmul.mubr.bf16.gmra.mrb[0].mxu0 %v228
    %v264 = vpop.f32.mrb[0].mxu0
    %v265 = vadd.f32 %v213, %v264
    %v266 = vpop.f32.mrb[0].mxu0
    %v267 = vpop.f32.mrb[0].mxu0
    %v268 = vadd.f32 %v213, %v267
    %v269 = vpop.f32.mrb[0].mxu0
    %270 = vdwg.mxu0
    %v271 = vpack.c.bf16 %v268, %v265
    %v273 = vunpack.c.l.b16 %v271
    %v274 = vunpack.c.h.b16 %v271
    %v275 = vpack.c.b16 %v273, %v273
    %v276 = vpack.c.b16 %v274, %v274
    %279 = vst [vmem:[#allocation8] sm:$0xf] %v275
    %280 = vst [vmem:[#allocation8 + $0x4] sm:$0xf] %v276
    // Predicated region
    $region42: #{tpu_custom_call.1} parent=1 // pred_check
      _
    $region43: #{tpu_custom_call.1} parent=1 // pred_check_branch
      %282 = sbr.rel (0) target = $region45
    $region44: #{tpu_custom_call.1} parent=1 // pred_region
      %s284 = ssub.s32 128, 128
      %285 = vsyncadd [#allocation4], %s284
      %s286 = sshll.u32 [#allocation8], 4
      %s287 = int_to_ptr.vmem [resolvable:$true] %s286
      %292 = dma.vmem_to_hbm [thread:$0]  %s287, 128, %s7, [#allocation4], 64, 64, 4
    $region45: #{tpu_custom_call.1} parent=1 // pred_fallthru
      _
    // Predicated region
    $region46: #{tpu_custom_call.1} parent=1 // pred_check
      _
    $region47: #{tpu_custom_call.1} parent=1 // pred_check_branch
      %294 = sbr.rel (0) target = $region49
    $region48: #{tpu_custom_call.1} parent=1 // pred_region
      %295 = dma.done [#allocation4], 128
    $region49: #{tpu_custom_call.1} parent=1 // pred_fallthru
      _
    %296 = vsyncpa [#allocation3], 1
    %297 = vsyncpa [#allocation6], 1
    %298 = vsyncpa [#allocation4], 1

</llo_original>
